<compile_context>
chip_gen: v7x
topology: tpu7x:2x2x1
jax: 0.10.0
libtpu: 0.0.40
codegen_flags: <defaults>
</compile_context>

<pallas_src>
import math
import numpy as np
import jax
import jax.numpy as jnp
from jax.experimental import pallas as pl
from jax.experimental.pallas import tpu as pltpu

_A = 1.0 / math.sqrt(2.0)
DEC_LO = np.array([_A, _A], dtype=np.float64)    # pywt.Wavelet('db1').dec_lo
DEC_HI = np.array([-_A, _A], dtype=np.float64)   # pywt.Wavelet('db1').dec_hi
assert DEC_LO.size == 2 and DEC_HI.size == 2, "only db1 (Haar, L == 2) supported"

_SCALE = 0.5 / math.sqrt(2.0)                    # (1/sqrt(2))**3
_LANE = 128


# ------------------------------ Pallas kernel --------------------------------
def _haar3_kernel(x_ref, o_ref):
    """x_ref: (8, bc, bt, lane) parity-major slabs, parity P = 4p + 2q + r with
    p/q/r the D/H/W parities of the source voxel.
    o_ref: (bc, 8, bt, lane) natural grouped-conv order, subband s' = 4bw+2bh+bd.
    Separable 3-stage butterfly (24 adds + 8 muls per voxel group), f32
    accumulation in registers, each subband stored directly (no scratch)."""
    f32 = jnp.float32
    # stage 1: combine the W parity r -> bw                  (8 adds)
    w = [None] * 8                                           # index = 4p + 2q + bw
    for pq in range(4):
        a = x_ref[2 * pq + 0].astype(f32)
        b = x_ref[2 * pq + 1].astype(f32)
        w[2 * pq + 0] = a + b
        w[2 * pq + 1] = a - b
    # stage 2 (H parity q -> bh) + stage 3 (D parity p -> bd), per bw
    for bw in range(2):
        h00 = w[0 + bw] + w[2 + bw]      # p=0, bh=0
        h01 = w[0 + bw] - w[2 + bw]      # p=0, bh=1
        h10 = w[4 + bw] + w[6 + bw]      # p=1, bh=0
        h11 = w[4 + bw] - w[6 + bw]      # p=1, bh=1
        o_ref[:, 4 * bw + 0] = ((h00 + h10) * _SCALE).astype(o_ref.dtype)  # bh=0 bd=0
        o_ref[:, 4 * bw + 1] = ((h00 - h10) * _SCALE).astype(o_ref.dtype)  # bh=0 bd=1
        o_ref[:, 4 * bw + 2] = ((h01 + h11) * _SCALE).astype(o_ref.dtype)  # bh=1 bd=0
        o_ref[:, 4 * bw + 3] = ((h01 - h11) * _SCALE).astype(o_ref.dtype)  # bh=1 bd=1


# ------------------------------ helpers ---------------------------------------
def _vmem_budget():
    """Generation-aware VMEM working-set target / compiler limit (bytes)."""
    cap = 64 * 1024 * 1024                      # conservative default (v7x per-TC)
    try:
        info = pltpu.get_tpu_info()
        c = int(getattr(info, "vmem_capacity_bytes", 0))
        if c > 0:
            cap = c
    except Exception:
        pass
    limit = max(32 * 1024 * 1024, min(96 * 1024 * 1024, (cap * 3) // 4))
    budget = (limit * 2) // 5                   # headroom for Mosaic temporaries
    return budget, limit


def _wpt_channel_perm(C):
    """perm[8*c + s'] = reference output channel for subband s' of reference
    input channel c (s' = 4bw+2bh+bd, the afb3d grouped-conv ordering).  This is
    exactly DWT3DForward's ll=y[:, :C] / high=y[:, C:] split followed by WPT3D's
    cat + 'b c f d h w -> b (c f) d h w' rearrange."""
    t = np.arange(8 * C)
    u = t - C
    return np.where(t < C, 8 * t, 8 * (u // 7) + (u % 7) + 1).astype(np.int64)


def _ceil_div(a, b):
    return -(-a // b)


def _round_up(a, m):
    return _ceil_div(a, m) * m


# ------------------------------ one analysis level -----------------------------
def _wpt_level_pallas(x, budget, limit):
    N, C, D, H, W = x.shape
    Dd, Hh, Ww = D // 2, H // 2, W // 2
    Ec = Dd * Hh * Ww
    NC = N * C
    dt = x.dtype
    isz = np.dtype(dt).itemsize
    row_align = max(8, 32 // isz)                # sublane packing for sub-32-bit

    # per-element VMEM: double-buffered input (8 parities) + double-buffered
    # output (8 subbands) + ~16 live f32 temporaries inside the butterfly.
    bytes_per_elem = 32 * isz + 16 * 4
    e_max = max(8 * _LANE, budget // bytes_per_elem)

    r0 = _round_up(_ceil_div(Ec, _LANE), row_align)
    if r0 * _LANE <= e_max:
        # whole per-channel volume per step; pack several channels if small.
        bt, t_steps, rp = r0, 1, r0
        cmax = max(1, e_max // (rp * _LANE))
        cmax = min(cmax, max(1, NC // min(NC, 4)))   # keep >=4 grid steps for overlap
        bc = 1
        for d in range(min(NC, cmax), 0, -1):
            if NC % d == 0:
                bc = d
                break
    else:
        bc = 1
        t_steps = _ceil_div(r0 * _LANE, e_max)
        bt = _round_up(_ceil_div(r0, t_steps), row_align)
        rp = t_steps * bt
    ecp = rp * _LANE

    # parity-major relayout (one XLA gather pass, dtype preserved); the pad up
    # to a whole number of (bt, lane) row tiles fuses into the same pass.
    x8 = x.reshape(N, C, Dd, 2, Hh, 2, Ww, 2)
    xt = jnp.transpose(x8, (3, 5, 7, 0, 1, 2, 4, 6)).reshape(8, NC, Ec)
    if ecp != Ec:
        xt = jnp.pad(xt, ((0, 0), (0, 0), (0, ecp - Ec)))
    xt = xt.reshape(8, NC, rp, _LANE)

    out = pl.pallas_call(
        _haar3_kernel,
        out_shape=jax.ShapeDtypeStruct((NC, 8, rp, _LANE), dt),
        grid=(NC // bc, t_steps),
        in_specs=[pl.BlockSpec((8, bc, bt, _LANE), lambda g, t: (0, g, t, 0))],
        out_specs=pl.BlockSpec((bc, 8, bt, _LANE), lambda g, t: (g, 0, t, 0)),
        compiler_params=pltpu.CompilerParams(
            dimension_semantics=("parallel", "parallel"),
            vmem_limit_bytes=limit,
        ),
    )(xt)

    # natural grouped order: output channel = 8*c + s'; drop the row padding.
    out = out.reshape(N, C * 8, ecp)
    if ecp != Ec:
        out = out[:, :, :Ec]
    return out.reshape(N, C * 8, Dd, Hh, Ww)


def _haar3_subbands_jnp(x):
    """Plain-jnp 2x2x2 Haar butterfly -> (N, C, 8, Dd, Hh, Ww), s' = 4bw+2bh+bd.
    Used only for tiny coarse levels where Pallas launch overhead dominates."""
    N, C, D, H, W = x.shape
    v = x.reshape(N, C, D // 2, 2, H // 2, 2, W // 2, 2).astype(jnp.float32)
    w0 = v[..., 0] + v[..., 1]
    w1 = v[..., 0] - v[..., 1]
    h00 = w0[..., 0, :] + w0[..., 1, :]
    h01 = w0[..., 0, :] - w0[..., 1, :]
    h10 = w1[..., 0, :] + w1[..., 1, :]
    h11 = w1[..., 0, :] - w1[..., 1, :]

    def dsplit(t):
        return t[:, :, :, 0] + t[:, :, :, 1], t[:, :, :, 0] - t[:, :, :, 1]

    d000, d001 = dsplit(h00)
    d010, d011 = dsplit(h01)
    d100, d101 = dsplit(h10)
    d110, d111 = dsplit(h11)
    subs = [d000, d001, d010, d011, d100, d101, d110, d111]
    y = jnp.stack(subs, axis=2) * _SCALE
    return y.astype(x.dtype)


def _wpt_one_level(x, budget, limit):
    # edge-replicate odd dims (matches afb1d_3d's N % 2 == 1 branch)
    if x.shape[2] % 2:
        x = jnp.concatenate([x, x[:, :, -1:]], axis=2)
    if x.shape[3] % 2:
        x = jnp.concatenate([x, x[:, :, :, -1:]], axis=3)
    if x.shape[4] % 2:
        x = jnp.concatenate([x, x[:, :, :, :, -1:]], axis=4)
    N, C, D, H, W = x.shape
    Ec = (D // 2) * (H // 2) * (W // 2)
    if Ec < 1024:
        # tiny coarse level: Pallas per-step overhead would dominate.
        y = _haar3_subbands_jnp(x)                   # (N, C, 8, Dd, Hh, Ww)
        return y.reshape(N, 8 * C, D // 2, H // 2, W // 2)
    return _wpt_level_pallas(x, budget, limit)


def wpt3d(x, J=4):
    """Mirror of WPT3D(J=J, wave='db1').forward(x), x in NCDHW layout."""
    budget, limit = _vmem_budget()
    # ref_of_pos[p] = reference (module-order) channel held at physical slot p.
    ref_of_pos = np.arange(x.shape[1], dtype=np.int64)
    for _ in range(J):
        c_in = x.shape[1]
        x = _wpt_one_level(x, budget, limit)          # natural order 8*p + s'
        perm = _wpt_channel_perm(c_in)
        ref_of_pos = perm[(8 * ref_of_pos[:, None] + np.arange(8)[None, :])].reshape(-1)
    if not np.array_equal(ref_of_pos, np.arange(ref_of_pos.size)):
        pos_of_ref = np.argsort(ref_of_pos)           # inverse permutation
        x = jnp.take(x, jnp.asarray(pos_of_ref, dtype=jnp.int32), axis=1)
    return x


# ---------------- NumPy reference (mirrors the PyTorch code path) -------------
def _np_afb1d_3d(x, h0, h1, dim):
    x = np.asarray(x, np.float64)
    h0 = np.asarray(h0, np.float64).ravel()
    h1 = np.asarray(h1, np.float64).ravel()
    L = h0.size
    L2 = L // 2
    xm = np.moveaxis(x, dim, -1)
    n = xm.shape[-1]
    if n % 2 == 1:
        xm = np.concatenate([xm, xm[..., -1:]], axis=-1)
        n += 1
    xm = np.roll(xm, -L2, axis=-1)
    pad = L - 1
    z = np.zeros(xm.shape[:-1] + (pad,), np.float64)
    xp = np.concatenate([z, xm, z], axis=-1)
    out_len = (n + 2 * pad - L) // 2 + 1
    lo = np.zeros(xm.shape[:-1] + (out_len,), np.float64)
    hi = np.zeros_like(lo)
    for o in range(out_len):
        seg = xp[..., 2 * o: 2 * o + L]
        lo[..., o] = seg @ h0
        hi[..., o] = seg @ h1
    n2 = n // 2
    if out_len > n2:
        lo[..., :L2] += lo[..., n2:n2 + L2]
        hi[..., :L2] += hi[..., n2:n2 + L2]
        lo = lo[..., :n2]
        hi = hi[..., :n2]
    lo = np.moveaxis(lo, -1, dim)
    hi = np.moveaxis(hi, -1, dim)
    C = x.shape[1]
    out_shape = list(lo.shape)
    out_shape[1] = 2 * C
    out = np.empty(out_shape, np.float64)
    out[:, 0::2] = lo          # grouped conv ordering: 2c = lo(c), 2c+1 = hi(c)
    out[:, 1::2] = hi
    return out


def _np_afb3d(x, h0, h1):
    y = _np_afb1d_3d(x, h0, h1, dim=4)
    y = _np_afb1d_3d(y, h0, h1, dim=3)
    y = _np_afb1d_3d(y, h0, h1, dim=2)
    return y


def _np_wpt_level(x, h0, h1):
    N, C = x.shape[:2]
    y = _np_afb3d(x, h0, h1)
    ll = y[:, :C]
    hi = y[:, C:]
    d, h, w = ll.shape[2:]
    X = np.concatenate([ll[:, :, None], hi.reshape(N, C, 7, d, h, w)], axis=2)
    return X.reshape(N, 8 * C, d, h, w)


def _np_wpt(x, J, h0, h1):
    for _ in range(J):
        x = _np_wpt_level(x, h0, h1)
    return x


# -------------------------------------------------------------------------------
if __name__ == "__main__":
    # prep_filt_afb1d reverses the decomposition filters before the conv
    h0 = DEC_LO[::-1].copy()
    h1 = DEC_HI[::-1].copy()

    wpt = jax.jit(wpt3d, static_argnames=("J",))

    # main case: level 1 (Ec = 4096) runs the Pallas kernel, level 2 (Ec = 512)
    # takes the tiny-level jnp path; the deferred channel permutation is applied
    # once at the end.
    N, C, S, J = 2, 3, 32, 2
    x = jax.random.normal(jax.random.PRNGKey(0), (N, C, S, S, S), dtype=jnp.float32)
    out = jax.block_until_ready(wpt(x, J=J))
    ref = _np_wpt(np.asarray(x, np.float64), J, h0, h1)
    expect = (N, C * 8 ** J, S // 2 ** J, S // 2 ** J, S // 2 ** J)
    assert out.shape == expect, (out.shape, expect)
    assert out.dtype == x.dtype, out.dtype
    np.testing.assert_allclose(np.asarray(out), ref, atol=1e-4, rtol=1e-4)

    # odd-dim + row-padding case: W = 17 exercises the edge-replication branch,
    # Ec = 1440 (not a multiple of 128) exercises the padded Pallas path.
    x2 = jax.random.normal(jax.random.PRNGKey(1), (1, 2, 32, 20, 17), dtype=jnp.float32)
    out2 = jax.block_until_ready(wpt(x2, J=1))
    ref2 = _np_wpt(np.asarray(x2, np.float64), 1, h0, h1)
    assert out2.shape == ref2.shape, (out2.shape, ref2.shape)
    np.testing.assert_allclose(np.asarray(out2), ref2, atol=1e-4, rtol=1e-4)

    print("KERNEL_OK")
</pallas_src>

<mosaic_0001>
module attributes {stable_mosaic.version = 11 : i64} {
  func.func @_haar3_kernel(%arg0: i32, %arg1: i32, %arg2: memref<8x1x32x128xf32, #tpu.memory_space<vmem>>, %arg3: memref<1x8x32x128xf32, #tpu.memory_space<vmem>>) attributes {dimension_semantics = [#tpu.dimension_semantics<parallel>, #tpu.dimension_semantics<parallel>], iteration_bounds = array<i64: 6, 1>, scalar_prefetch = 0 : i64, scratch_operands = 0 : i64, tpu.core_type = #tpu.core_type<tc>, window_params = [{transform_indices = @transform_0, window_bounds = array<i64: 8, 1, 32, 128>}, {transform_indices = @transform_1, window_bounds = array<i64: 1, 8, 32, 128>}]} {
    %c0 = arith.constant 0 : index
    %c0_0 = arith.constant 0 : index
    %c0_1 = arith.constant 0 : index
    %c0_2 = arith.constant 0 : index
    %0 = vector.load %arg2[%c0, %c0_0, %c0_1, %c0_2] : memref<8x1x32x128xf32, #tpu.memory_space<vmem>>, vector<1x1x32x128xf32>
    %1 = vector.shape_cast %0 : vector<1x1x32x128xf32> to vector<1x32x128xf32>
    %c1 = arith.constant 1 : index
    %c0_3 = arith.constant 0 : index
    %c0_4 = arith.constant 0 : index
    %c0_5 = arith.constant 0 : index
    %2 = vector.load %arg2[%c1, %c0_3, %c0_4, %c0_5] : memref<8x1x32x128xf32, #tpu.memory_space<vmem>>, vector<1x1x32x128xf32>
    %3 = vector.shape_cast %2 : vector<1x1x32x128xf32> to vector<1x32x128xf32>
    %4 = arith.addf %1, %3 : vector<1x32x128xf32>
    %5 = arith.subf %1, %3 : vector<1x32x128xf32>
    %c2 = arith.constant 2 : index
    %c0_6 = arith.constant 0 : index
    %c0_7 = arith.constant 0 : index
    %c0_8 = arith.constant 0 : index
    %6 = vector.load %arg2[%c2, %c0_6, %c0_7, %c0_8] : memref<8x1x32x128xf32, #tpu.memory_space<vmem>>, vector<1x1x32x128xf32>
    %7 = vector.shape_cast %6 : vector<1x1x32x128xf32> to vector<1x32x128xf32>
    %c3 = arith.constant 3 : index
    %c0_9 = arith.constant 0 : index
    %c0_10 = arith.constant 0 : index
    %c0_11 = arith.constant 0 : index
    %8 = vector.load %arg2[%c3, %c0_9, %c0_10, %c0_11] : memref<8x1x32x128xf32, #tpu.memory_space<vmem>>, vector<1x1x32x128xf32>
    %9 = vector.shape_cast %8 : vector<1x1x32x128xf32> to vector<1x32x128xf32>
    %10 = arith.addf %7, %9 : vector<1x32x128xf32>
    %11 = arith.subf %7, %9 : vector<1x32x128xf32>
    %c4 = arith.constant 4 : index
    %c0_12 = arith.constant 0 : index
    %c0_13 = arith.constant 0 : index
    %c0_14 = arith.constant 0 : index
    %12 = vector.load %arg2[%c4, %c0_12, %c0_13, %c0_14] : memref<8x1x32x128xf32, #tpu.memory_space<vmem>>, vector<1x1x32x128xf32>
    %13 = vector.shape_cast %12 : vector<1x1x32x128xf32> to vector<1x32x128xf32>
    %c5 = arith.constant 5 : index
    %c0_15 = arith.constant 0 : index
    %c0_16 = arith.constant 0 : index
    %c0_17 = arith.constant 0 : index
    %14 = vector.load %arg2[%c5, %c0_15, %c0_16, %c0_17] : memref<8x1x32x128xf32, #tpu.memory_space<vmem>>, vector<1x1x32x128xf32>
    %15 = vector.shape_cast %14 : vector<1x1x32x128xf32> to vector<1x32x128xf32>
    %16 = arith.addf %13, %15 : vector<1x32x128xf32>
    %17 = arith.subf %13, %15 : vector<1x32x128xf32>
    %c6 = arith.constant 6 : index
    %c0_18 = arith.constant 0 : index
    %c0_19 = arith.constant 0 : index
    %c0_20 = arith.constant 0 : index
    %18 = vector.load %arg2[%c6, %c0_18, %c0_19, %c0_20] : memref<8x1x32x128xf32, #tpu.memory_space<vmem>>, vector<1x1x32x128xf32>
    %19 = vector.shape_cast %18 : vector<1x1x32x128xf32> to vector<1x32x128xf32>
    %c7 = arith.constant 7 : index
    %c0_21 = arith.constant 0 : index
    %c0_22 = arith.constant 0 : index
    %c0_23 = arith.constant 0 : index
    %20 = vector.load %arg2[%c7, %c0_21, %c0_22, %c0_23] : memref<8x1x32x128xf32, #tpu.memory_space<vmem>>, vector<1x1x32x128xf32>
    %21 = vector.shape_cast %20 : vector<1x1x32x128xf32> to vector<1x32x128xf32>
    %22 = arith.addf %19, %21 : vector<1x32x128xf32>
    %23 = arith.subf %19, %21 : vector<1x32x128xf32>
    %24 = arith.addf %4, %10 : vector<1x32x128xf32>
    %25 = arith.subf %4, %10 : vector<1x32x128xf32>
    %26 = arith.addf %16, %22 : vector<1x32x128xf32>
    %27 = arith.subf %16, %22 : vector<1x32x128xf32>
    %28 = arith.addf %24, %26 : vector<1x32x128xf32>
    %cst = arith.constant 0.353553385 : f32
    %29 = vector.broadcast %cst : f32 to vector<1x32x128xf32>
    %30 = arith.mulf %28, %29 : vector<1x32x128xf32>
    %c0_24 = arith.constant 0 : index
    %c0_25 = arith.constant 0 : index
    %c0_26 = arith.constant 0 : index
    %c0_27 = arith.constant 0 : index
    %31 = vector.load %arg3[%c0_24, %c0_25, %c0_26, %c0_27] : memref<1x8x32x128xf32, #tpu.memory_space<vmem>>, vector<1x1x32x128xf32>
    %32 = vector.shape_cast %31 : vector<1x1x32x128xf32> to vector<1x32x128xf32>
    %33 = vector.shape_cast %30 : vector<1x32x128xf32> to vector<1x1x32x128xf32>
    tpu.vector_store %arg3[%c0_24, %c0_25, %c0_26, %c0_27], %33 {strides = array<i32>} : memref<1x8x32x128xf32, #tpu.memory_space<vmem>>, vector<1x1x32x128xf32>,
    %34 = arith.subf %24, %26 : vector<1x32x128xf32>
    %cst_28 = arith.constant 0.353553385 : f32
    %35 = vector.broadcast %cst_28 : f32 to vector<1x32x128xf32>
    %36 = arith.mulf %34, %35 : vector<1x32x128xf32>
    %c0_29 = arith.constant 0 : index
    %c1_30 = arith.constant 1 : index
    %c0_31 = arith.constant 0 : index
    %c0_32 = arith.constant 0 : index
    %37 = vector.load %arg3[%c0_29, %c1_30, %c0_31, %c0_32] : memref<1x8x32x128xf32, #tpu.memory_space<vmem>>, vector<1x1x32x128xf32>
    %38 = vector.shape_cast %37 : vector<1x1x32x128xf32> to vector<1x32x128xf32>
    %39 = vector.shape_cast %36 : vector<1x32x128xf32> to vector<1x1x32x128xf32>
    tpu.vector_store %arg3[%c0_29, %c1_30, %c0_31, %c0_32], %39 {strides = array<i32>} : memref<1x8x32x128xf32, #tpu.memory_space<vmem>>, vector<1x1x32x128xf32>,
    %40 = arith.addf %25, %27 : vector<1x32x128xf32>
    %cst_33 = arith.constant 0.353553385 : f32
    %41 = vector.broadcast %cst_33 : f32 to vector<1x32x128xf32>
    %42 = arith.mulf %40, %41 : vector<1x32x128xf32>
    %c0_34 = arith.constant 0 : index
    %c2_35 = arith.constant 2 : index
    %c0_36 = arith.constant 0 : index
    %c0_37 = arith.constant 0 : index
    %43 = vector.load %arg3[%c0_34, %c2_35, %c0_36, %c0_37] : memref<1x8x32x128xf32, #tpu.memory_space<vmem>>, vector<1x1x32x128xf32>
    %44 = vector.shape_cast %43 : vector<1x1x32x128xf32> to vector<1x32x128xf32>
    %45 = vector.shape_cast %42 : vector<1x32x128xf32> to vector<1x1x32x128xf32>
    tpu.vector_store %arg3[%c0_34, %c2_35, %c0_36, %c0_37], %45 {strides = array<i32>} : memref<1x8x32x128xf32, #tpu.memory_space<vmem>>, vector<1x1x32x128xf32>,
    %46 = arith.subf %25, %27 : vector<1x32x128xf32>
    %cst_38 = arith.constant 0.353553385 : f32
    %47 = vector.broadcast %cst_38 : f32 to vector<1x32x128xf32>
    %48 = arith.mulf %46, %47 : vector<1x32x128xf32>
    %c0_39 = arith.constant 0 : index
    %c3_40 = arith.constant 3 : index
    %c0_41 = arith.constant 0 : index
    %c0_42 = arith.constant 0 : index
    %49 = vector.load %arg3[%c0_39, %c3_40, %c0_41, %c0_42] : memref<1x8x32x128xf32, #tpu.memory_space<vmem>>, vector<1x1x32x128xf32>
    %50 = vector.shape_cast %49 : vector<1x1x32x128xf32> to vector<1x32x128xf32>
    %51 = vector.shape_cast %48 : vector<1x32x128xf32> to vector<1x1x32x128xf32>
    tpu.vector_store %arg3[%c0_39, %c3_40, %c0_41, %c0_42], %51 {strides = array<i32>} : memref<1x8x32x128xf32, #tpu.memory_space<vmem>>, vector<1x1x32x128xf32>,
    %52 = arith.addf %5, %11 : vector<1x32x128xf32>
    %53 = arith.subf %5, %11 : vector<1x32x128xf32>
    %54 = arith.addf %17, %23 : vector<1x32x128xf32>
    %55 = arith.subf %17, %23 : vector<1x32x128xf32>
    %56 = arith.addf %52, %54 : vector<1x32x128xf32>
    %cst_43 = arith.constant 0.353553385 : f32
    %57 = vector.broadcast %cst_43 : f32 to vector<1x32x128xf32>
    %58 = arith.mulf %56, %57 : vector<1x32x128xf32>
    %c0_44 = arith.constant 0 : index
    %c4_45 = arith.constant 4 : index
    %c0_46 = arith.constant 0 : index
    %c0_47 = arith.constant 0 : index
    %59 = vector.load %arg3[%c0_44, %c4_45, %c0_46, %c0_47] : memref<1x8x32x128xf32, #tpu.memory_space<vmem>>, vector<1x1x32x128xf32>
    %60 = vector.shape_cast %59 : vector<1x1x32x128xf32> to vector<1x32x128xf32>
    %61 = vector.shape_cast %58 : vector<1x32x128xf32> to vector<1x1x32x128xf32>
    tpu.vector_store %arg3[%c0_44, %c4_45, %c0_46, %c0_47], %61 {strides = array<i32>} : memref<1x8x32x128xf32, #tpu.memory_space<vmem>>, vector<1x1x32x128xf32>,
    %62 = arith.subf %52, %54 : vector<1x32x128xf32>
    %cst_48 = arith.constant 0.353553385 : f32
    %63 = vector.broadcast %cst_48 : f32 to vector<1x32x128xf32>
    %64 = arith.mulf %62, %63 : vector<1x32x128xf32>
    %c0_49 = arith.constant 0 : index
    %c5_50 = arith.constant 5 : index
    %c0_51 = arith.constant 0 : index
    %c0_52 = arith.constant 0 : index
    %65 = vector.load %arg3[%c0_49, %c5_50, %c0_51, %c0_52] : memref<1x8x32x128xf32, #tpu.memory_space<vmem>>, vector<1x1x32x128xf32>
    %66 = vector.shape_cast %65 : vector<1x1x32x128xf32> to vector<1x32x128xf32>
    %67 = vector.shape_cast %64 : vector<1x32x128xf32> to vector<1x1x32x128xf32>
    tpu.vector_store %arg3[%c0_49, %c5_50, %c0_51, %c0_52], %67 {strides = array<i32>} : memref<1x8x32x128xf32, #tpu.memory_space<vmem>>, vector<1x1x32x128xf32>,
    %68 = arith.addf %53, %55 : vector<1x32x128xf32>
    %cst_53 = arith.constant 0.353553385 : f32
    %69 = vector.broadcast %cst_53 : f32 to vector<1x32x128xf32>
    %70 = arith.mulf %68, %69 : vector<1x32x128xf32>
    %c0_54 = arith.constant 0 : index
    %c6_55 = arith.constant 6 : index
    %c0_56 = arith.constant 0 : index
    %c0_57 = arith.constant 0 : index
    %71 = vector.load %arg3[%c0_54, %c6_55, %c0_56, %c0_57] : memref<1x8x32x128xf32, #tpu.memory_space<vmem>>, vector<1x1x32x128xf32>
    %72 = vector.shape_cast %71 : vector<1x1x32x128xf32> to vector<1x32x128xf32>
    %73 = vector.shape_cast %70 : vector<1x32x128xf32> to vector<1x1x32x128xf32>
    tpu.vector_store %arg3[%c0_54, %c6_55, %c0_56, %c0_57], %73 {strides = array<i32>} : memref<1x8x32x128xf32, #tpu.memory_space<vmem>>, vector<1x1x32x128xf32>,
    %74 = arith.subf %53, %55 : vector<1x32x128xf32>
    %cst_58 = arith.constant 0.353553385 : f32
    %75 = vector.broadcast %cst_58 : f32 to vector<1x32x128xf32>
    %76 = arith.mulf %74, %75 : vector<1x32x128xf32>
    %c0_59 = arith.constant 0 : index
    %c7_60 = arith.constant 7 : index
    %c0_61 = arith.constant 0 : index
    %c0_62 = arith.constant 0 : index
    %77 = vector.load %arg3[%c0_59, %c7_60, %c0_61, %c0_62] : memref<1x8x32x128xf32, #tpu.memory_space<vmem>>, vector<1x1x32x128xf32>
    %78 = vector.shape_cast %77 : vector<1x1x32x128xf32> to vector<1x32x128xf32>
    %79 = vector.shape_cast %76 : vector<1x32x128xf32> to vector<1x1x32x128xf32>
    tpu.vector_store %arg3[%c0_59, %c7_60, %c0_61, %c0_62], %79 {strides = array<i32>} : memref<1x8x32x128xf32, #tpu.memory_space<vmem>>, vector<1x1x32x128xf32>,
    return
  }
  func.func @transform_0(%arg0: i32, %arg1: i32) -> (i32, i32, i32, i32) {
    %c0_i32 = arith.constant 0 : i32
    %c0_i32_0 = arith.constant 0 : i32
    %c0_i32_1 = arith.constant 0 : i32
    return %c0_i32, %arg0, %arg1, %c0_i32_0 : i32, i32, i32, i32
  }
  func.func @transform_1(%arg0: i32, %arg1: i32) -> (i32, i32, i32, i32) {
    %c0_i32 = arith.constant 0 : i32
    %c0_i32_0 = arith.constant 0 : i32
    %c0_i32_1 = arith.constant 0 : i32
    return %arg0, %c0_i32, %arg1, %c0_i32_0 : i32, i32, i32, i32
  }
}

</mosaic_0001>

<llo_original>
// kernel: wpt3d.1
$region0: #{wpt3d.1}
  #allocation0 [shape = 'u32[]', space=smem, size = 0x4, offset = 0x4, fixed_abs, tag = 'smem constant byte address 0x4 - core index']
  #allocation1 [shape = 'u32[144,128]{1,0:T(1,128)}', space=vmem, size = 0x12000, scoped, tag = 'internal scratch']
  %s0 = inlined_call_operand.vmem [shape: f32[8,6,32,128], index: 0, kind: input, shape index: {}]
  %s1 = inlined_call_operand.vmem [shape: f32[6,8,32,128], index: 1, kind: output, shape index: {}]
  %s2 = sld [smem:[#allocation0]]
  $region75: #{wpt3d.1} parent=0
    _
  %s4 = ssub.s32 1, %s2
  %s5 = scalar_select 0, %s4, %s2
  $region1: #{wpt3d.1} parent=0
    #allocation2 [shape = 'u8[262144]{0}', space=vmem, size = 0x40000, scoped, tag = 'input window, operand 0']
    loop: start=0, step=1, limit=8
    $region2: #{wpt3d.1} parent=1 // loop_pre_header
      _
    $region3: #{wpt3d.1} parent=1 // loop_header
      %s7 = sphi 0, %s11
      %p8 = scmp.ge.s32.totalorder %s7, 8
      %s14 = sphi 0, %s26
      %s15 = sphi 0, %s22
      %s16 = sphi 0, %s14
      %s17 = sphi 0, %s15
      %s18 = sphi 0, %s16
      %s19 = sphi 0, %s17
      %s31 = sphi 0, %s33
      %s34 = sphi 0, %s31
      %s35 = sphi 0, %s34
      %s51 = sphi 0, %s35
      %s59 = sphi 0, %s61
      %s62 = sphi 0, %s59
      %s63 = sphi 0, %s62
      %s79 = sphi 0, %s63
    $region4: #{wpt3d.1} parent=1 // loop_header_branch
      %10 = sbr.rel (%p8) target = $region8
    $region5: #{wpt3d.1} parent=1 // loop_body
      %s12 = ssub.s32 %s7, 1
      %s13 = ssub.s32 %s7, 2
      %s20 = sadd.s32 1, %s15
      %p21 = scmp.ge.s32.totalorder %s20, 1
      %s22 = scalar_select %p21, 0, %s20
      %s23 = sadd.s32 1, %s14
      %s24 = scalar_select %p21, %s23, %s14
      %p25 = scmp.ge.s32.totalorder %s24, 6
      %s26 = scalar_select %p25, 0, %s24
      %s27 = ssub.s32 %s14, %s26
      %s28 = ssub.s32 %s15, %s22
      %s29 = sor.u32 %s27, %s28
      %p30 = scmp.eq.s32.totalorder %s29, 0
      %s32 = sadd.s32 %s31, 1
      %s33 = scalar_select %p30, %s31, %s32
      %p36 = pneg %p30
      %p37 = scmp.eq.s32.totalorder %s7, 5
      %p38 = por %p36, %p37
      %p39 = scmp.ne.s32.totalorder %s31, %s34
      %p40 = scmp.eq.s32.totalorder %s7, 0
      %p41 = por %p39, %p40
      %p42 = scmp.ne.s32.totalorder %s31, %s34
      %p43 = scmp.eq.s32.totalorder %s12, 5
      %p44 = por %p42, %p43
      %p45 = scmp.ne.s32.totalorder %s34, %s35
      %p46 = scmp.eq.s32.totalorder %s12, 0
      %p47 = por %p45, %p46
      %p48 = scmp.ne.s32.totalorder %s34, %s35
      %p49 = scmp.eq.s32.totalorder %s13, 5
      %p50 = por %p48, %p49
      %p52 = scmp.ne.s32.totalorder %s35, %s51
      %p53 = scmp.eq.s32.totalorder %s13, 0
      %p54 = por %p52, %p53
      %s55 = ssub.s32 %s14, %s26
      %s56 = ssub.s32 %s15, %s22
      %s57 = sor.u32 %s55, %s56
      %p58 = scmp.eq.s32.totalorder %s57, 0
      %s60 = sadd.s32 %s59, 1
      %s61 = scalar_select %p58, %s59, %s60
      %p64 = pneg %p58
      %p65 = scmp.eq.s32.totalorder %s7, 5
      %p66 = por %p64, %p65
      %p67 = scmp.ne.s32.totalorder %s59, %s62
      %p68 = scmp.eq.s32.totalorder %s7, 0
      %p69 = por %p67, %p68
      %p70 = scmp.ne.s32.totalorder %s59, %s62
      %p71 = scmp.eq.s32.totalorder %s12, 5
      %p72 = por %p70, %p71
      %p73 = scmp.ne.s32.totalorder %s62, %s63
      %p74 = scmp.eq.s32.totalorder %s12, 0
      %p75 = por %p73, %p74
      %p76 = scmp.ne.s32.totalorder %s62, %s63
      %p77 = scmp.eq.s32.totalorder %s13, 5
      %p78 = por %p76, %p77
      %p80 = scmp.ne.s32.totalorder %s63, %s79
      %p81 = scmp.eq.s32.totalorder %s13, 0
      %p82 = por %p80, %p81
      %p83 = scmp.le.s32.totalorder 1, %s7
      %p84 = scmp.lt.s32.totalorder %s7, 7
      %p85 = pnand %p83, %p84
      %p86 = pneg %p85
      // Predicated region
      $region9: #{wpt3d.1} parent=5 // pred_check
        _
      $region10: #{wpt3d.1} parent=5 // pred_check_branch
        %88 = sbr.rel (%p85) target = $region12
      $region11: #{wpt3d.1} parent=5 // pred_region
        %s89 = ssub.s32 %s7, 1
      $region12: #{wpt3d.1} parent=5 // pred_fallthru
        _
      %p90 = scmp.lt.s32.totalorder %s7, 6
      // Predicated region
      $region13: #{wpt3d.1} parent=5 // pred_check
        %p91 = pneg %p90
      $region14: #{wpt3d.1} parent=5 // pred_check_branch
        %93 = sbr.rel (%p91) target = $region16
      $region15: #{wpt3d.1} parent=5 // pred_region
        // Predicated region
        $region17: #{wpt3d.1} parent=15 // pred_check
          %p94 = pneg %p41
        $region18: #{wpt3d.1} parent=15 // pred_check_branch
          %96 = sbr.rel (%p94) target = $region20
        $region19: #{wpt3d.1} parent=15 // pred_region
          %s97 = sand.u32 %s31, 1
          %s98 = sand.u32 %s31, 1
          %s99 = smul.addr %s98, 256
          %s100 = scalar_lea.vmem [#allocation2], %s99
          %s101 = smul.u32 4, %s15
          %s102 = smul.addr %s14, 4
          %s103 = sadd.s32 %s101, %s102
          %s104 = smul.addr %s103, 8
          %s105 = scalar_lea.vmem %s0, %s104
          // Predicated region
          $region21: #{wpt3d.1} parent=19 // pred_check
            _
          $region22: #{wpt3d.1} parent=19 // pred_check_branch
            %107 = sbr.rel (0) target = $region24
          $region23: #{wpt3d.1} parent=19 // pred_region
            // Predicated region
            $region25: #{wpt3d.1} parent=23 // pred_check
              _
            $region26: #{wpt3d.1} parent=23 // pred_check_branch
              %109 = sbr.rel (0) target = $region28
            $region27: #{wpt3d.1} parent=23 // pred_region
              // Predicated region
              $region40: #{wpt3d.1} parent=27 // pred_check
                _
              $region41: #{wpt3d.1} parent=27 // pred_check_branch
                %186 = sbr.rel (0) target = $region43
              $region42: #{wpt3d.1} parent=27 // pred_region
                loop: start=0, step=1, limit=1
                $region44: #{wpt3d.1} parent=42 // loop_pre_header
                  _
                $region45: #{wpt3d.1} parent=42 // loop_header
                  %s188 = sphi 0, %s192
                  %p189 = scmp.ge.s32.totalorder %s188, 1
                  %s193 = sphi %s105, %s105
                  %s194 = sphi %s100, %s100
                $region46: #{wpt3d.1} parent=42 // loop_header_branch
                  %191 = sbr.rel (%p189) target = $region50
                $region47: #{wpt3d.1} parent=42 // loop_body
                  %v195 = vld [vmem:[%s193] sm:$0xff]
                  %196 = vst [vmem:[%s194] sm:$0xff] %v195
                  %v197 = vld [vmem:[%s193 + $0x8] sm:$0xff]
                  %198 = vst [vmem:[%s194 + $0x8] sm:$0xff] %v197
                  %v199 = vld [vmem:[%s193 + $0x10] sm:$0xff]
                  %200 = vst [vmem:[%s194 + $0x10] sm:$0xff] %v199
                  %v201 = vld [vmem:[%s193 + $0x18] sm:$0xff]
                  %202 = vst [vmem:[%s194 + $0x18] sm:$0xff] %v201
                  %v203 = vld [vmem:[%s193 + $0xc0] sm:$0xff]
                  %204 = vst [vmem:[%s194 + $0x20] sm:$0xff] %v203
                  %v205 = vld [vmem:[%s193 + $0xc8] sm:$0xff]
                  %206 = vst [vmem:[%s194 + $0x28] sm:$0xff] %v205
                  %v207 = vld [vmem:[%s193 + $0xd0] sm:$0xff]
                  %208 = vst [vmem:[%s194 + $0x30] sm:$0xff] %v207
                  %v209 = vld [vmem:[%s193 + $0xd8] sm:$0xff]
                  %210 = vst [vmem:[%s194 + $0x38] sm:$0xff] %v209
                  %v211 = vld [vmem:[%s193 + $0x180] sm:$0xff]
                  %212 = vst [vmem:[%s194 + $0x40] sm:$0xff] %v211
                  %v213 = vld [vmem:[%s193 + $0x188] sm:$0xff]
                  %214 = vst [vmem:[%s194 + $0x48] sm:$0xff] %v213
                  %v215 = vld [vmem:[%s193 + $0x190] sm:$0xff]
                  %216 = vst [vmem:[%s194 + $0x50] sm:$0xff] %v215
                  %v217 = vld [vmem:[%s193 + $0x198] sm:$0xff]
                  %218 = vst [vmem:[%s194 + $0x58] sm:$0xff] %v217
                  %v219 = vld [vmem:[%s193 + $0x240] sm:$0xff]
                  %220 = vst [vmem:[%s194 + $0x60] sm:$0xff] %v219
                  %v221 = vld [vmem:[%s193 + $0x248] sm:$0xff]
                  %222 = vst [vmem:[%s194 + $0x68] sm:$0xff] %v221
                  %v223 = vld [vmem:[%s193 + $0x250] sm:$0xff]
                  %224 = vst [vmem:[%s194 + $0x70] sm:$0xff] %v223
                  %v225 = vld [vmem:[%s193 + $0x258] sm:$0xff]
                  %226 = vst [vmem:[%s194 + $0x78] sm:$0xff] %v225
                  %v227 = vld [vmem:[%s193 + $0x300] sm:$0xff]
                  %228 = vst [vmem:[%s194 + $0x80] sm:$0xff] %v227
                  %v229 = vld [vmem:[%s193 + $0x308] sm:$0xff]
                  %230 = vst [vmem:[%s194 + $0x88] sm:$0xff] %v229
                  %v231 = vld [vmem:[%s193 + $0x310] sm:$0xff]
                  %232 = vst [vmem:[%s194 + $0x90] sm:$0xff] %v231
                  %v233 = vld [vmem:[%s193 + $0x318] sm:$0xff]
                  %234 = vst [vmem:[%s194 + $0x98] sm:$0xff] %v233
                  %v235 = vld [vmem:[%s193 + $0x3c0] sm:$0xff]
                  %236 = vst [vmem:[%s194 + $0xa0] sm:$0xff] %v235
                  %v237 = vld [vmem:[%s193 + $0x3c8] sm:$0xff]
                  %238 = vst [vmem:[%s194 + $0xa8] sm:$0xff] %v237
                  %v239 = vld [vmem:[%s193 + $0x3d0] sm:$0xff]
                  %240 = vst [vmem:[%s194 + $0xb0] sm:$0xff] %v239
                  %v241 = vld [vmem:[%s193 + $0x3d8] sm:$0xff]
                  %242 = vst [vmem:[%s194 + $0xb8] sm:$0xff] %v241
                  %v243 = vld [vmem:[%s193 + $0x480] sm:$0xff]
                  %244 = vst [vmem:[%s194 + $0xc0] sm:$0xff] %v243
                  %v245 = vld [vmem:[%s193 + $0x488] sm:$0xff]
                  %246 = vst [vmem:[%s194 + $0xc8] sm:$0xff] %v245
                  %v247 = vld [vmem:[%s193 + $0x490] sm:$0xff]
                  %248 = vst [vmem:[%s194 + $0xd0] sm:$0xff] %v247
                  %v249 = vld [vmem:[%s193 + $0x498] sm:$0xff]
                  %250 = vst [vmem:[%s194 + $0xd8] sm:$0xff] %v249
                  %v251 = vld [vmem:[%s193 + $0x540] sm:$0xff]
                  %252 = vst [vmem:[%s194 + $0xe0] sm:$0xff] %v251
                  %v253 = vld [vmem:[%s193 + $0x548] sm:$0xff]
                  %254 = vst [vmem:[%s194 + $0xe8] sm:$0xff] %v253
                  %v255 = vld [vmem:[%s193 + $0x550] sm:$0xff]
                  %256 = vst [vmem:[%s194 + $0xf0] sm:$0xff] %v255
                  %v257 = vld [vmem:[%s193 + $0x558] sm:$0xff]
                  %258 = vst [vmem:[%s194 + $0xf8] sm:$0xff] %v257
                $region48: #{wpt3d.1} parent=42 // loop_footer
                  %s192 = sadd.s32 1, %s188
                $region49: #{wpt3d.1} parent=42 // loop_footer_branch
                  %187 = sbr.rel target = $region45
                $region50: #{wpt3d.1} parent=42 // loop_exit
                  _
              $region43: #{wpt3d.1} parent=27 // pred_fallthru
                _
              // Predicated region
              $region51: #{wpt3d.1} parent=27 // pred_check
                _
              $region52: #{wpt3d.1} parent=27 // pred_check_branch
                %260 = sbr.rel target = $region54
              $region53: #{wpt3d.1} parent=27 // pred_region
                _
              $region54: #{wpt3d.1} parent=27 // pred_fallthru
                _
            $region28: #{wpt3d.1} parent=23 // pred_fallthru
              _
            // Predicated region
            $region29: #{wpt3d.1} parent=23 // pred_check
              _
            $region30: #{wpt3d.1} parent=23 // pred_check_branch
              %111 = sbr.rel target = $region32
            $region31: #{wpt3d.1} parent=23 // pred_region
              loop: start=0, step=1, limit=1
              $region33: #{wpt3d.1} parent=31 // loop_pre_header
                _
              $region34: #{wpt3d.1} parent=31 // loop_header
                %s114 = sphi 0, %s118
                %p115 = scmp.ge.s32.totalorder %s114, 1
                %s119 = sphi %s105, %s105
                %s120 = sphi %s100, %s100
              $region35: #{wpt3d.1} parent=31 // loop_header_branch
                %117 = sbr.rel (%p115) target = $region39
              $region36: #{wpt3d.1} parent=31 // loop_body
                %v121 = vld [vmem:[%s119] sm:$0xff]
                %122 = vst [vmem:[%s120] sm:$0xff] %v121
                %v123 = vld [vmem:[%s119 + $0x8] sm:$0xff]
                %124 = vst [vmem:[%s120 + $0x8] sm:$0xff] %v123
                %v125 = vld [vmem:[%s119 + $0x10] sm:$0xff]
                %126 = vst [vmem:[%s120 + $0x10] sm:$0xff] %v125
                %v127 = vld [vmem:[%s119 + $0x18] sm:$0xff]
                %128 = vst [vmem:[%s120 + $0x18] sm:$0xff] %v127
                %v129 = vld [vmem:[%s119 + $0xc0] sm:$0xff]
                %130 = vst [vmem:[%s120 + $0x20] sm:$0xff] %v129
                %v131 = vld [vmem:[%s119 + $0xc8] sm:$0xff]
                %132 = vst [vmem:[%s120 + $0x28] sm:$0xff] %v131
                %v133 = vld [vmem:[%s119 + $0xd0] sm:$0xff]
                %134 = vst [vmem:[%s120 + $0x30] sm:$0xff] %v133
                %v135 = vld [vmem:[%s119 + $0xd8] sm:$0xff]
                %136 = vst [vmem:[%s120 + $0x38] sm:$0xff] %v135
                %v137 = vld [vmem:[%s119 + $0x180] sm:$0xff]
                %138 = vst [vmem:[%s120 + $0x40] sm:$0xff] %v137
                %v139 = vld [vmem:[%s119 + $0x188] sm:$0xff]
                %140 = vst [vmem:[%s120 + $0x48] sm:$0xff] %v139
                %v141 = vld [vmem:[%s119 + $0x190] sm:$0xff]
                %142 = vst [vmem:[%s120 + $0x50] sm:$0xff] %v141
                %v143 = vld [vmem:[%s119 + $0x198] sm:$0xff]
                %144 = vst [vmem:[%s120 + $0x58] sm:$0xff] %v143
                %v145 = vld [vmem:[%s119 + $0x240] sm:$0xff]
                %146 = vst [vmem:[%s120 + $0x60] sm:$0xff] %v145
                %v147 = vld [vmem:[%s119 + $0x248] sm:$0xff]
                %148 = vst [vmem:[%s120 + $0x68] sm:$0xff] %v147
                %v149 = vld [vmem:[%s119 + $0x250] sm:$0xff]
                %150 = vst [vmem:[%s120 + $0x70] sm:$0xff] %v149
                %v151 = vld [vmem:[%s119 + $0x258] sm:$0xff]
                %152 = vst [vmem:[%s120 + $0x78] sm:$0xff] %v151
                %v153 = vld [vmem:[%s119 + $0x300] sm:$0xff]
                %154 = vst [vmem:[%s120 + $0x80] sm:$0xff] %v153
                %v155 = vld [vmem:[%s119 + $0x308] sm:$0xff]
                %156 = vst [vmem:[%s120 + $0x88] sm:$0xff] %v155
                %v157 = vld [vmem:[%s119 + $0x310] sm:$0xff]
                %158 = vst [vmem:[%s120 + $0x90] sm:$0xff] %v157
                %v159 = vld [vmem:[%s119 + $0x318] sm:$0xff]
                %160 = vst [vmem:[%s120 + $0x98] sm:$0xff] %v159
                %v161 = vld [vmem:[%s119 + $0x3c0] sm:$0xff]
                %162 = vst [vmem:[%s120 + $0xa0] sm:$0xff] %v161
                %v163 = vld [vmem:[%s119 + $0x3c8] sm:$0xff]
                %164 = vst [vmem:[%s120 + $0xa8] sm:$0xff] %v163
                %v165 = vld [vmem:[%s119 + $0x3d0] sm:$0xff]
                %166 = vst [vmem:[%s120 + $0xb0] sm:$0xff] %v165
                %v167 = vld [vmem:[%s119 + $0x3d8] sm:$0xff]
                %168 = vst [vmem:[%s120 + $0xb8] sm:$0xff] %v167
                %v169 = vld [vmem:[%s119 + $0x480] sm:$0xff]
                %170 = vst [vmem:[%s120 + $0xc0] sm:$0xff] %v169
                %v171 = vld [vmem:[%s119 + $0x488] sm:$0xff]
                %172 = vst [vmem:[%s120 + $0xc8] sm:$0xff] %v171
                %v173 = vld [vmem:[%s119 + $0x490] sm:$0xff]
                %174 = vst [vmem:[%s120 + $0xd0] sm:$0xff] %v173
                %v175 = vld [vmem:[%s119 + $0x498] sm:$0xff]
                %176 = vst [vmem:[%s120 + $0xd8] sm:$0xff] %v175
                %v177 = vld [vmem:[%s119 + $0x540] sm:$0xff]
                %178 = vst [vmem:[%s120 + $0xe0] sm:$0xff] %v177
                %v179 = vld [vmem:[%s119 + $0x548] sm:$0xff]
                %180 = vst [vmem:[%s120 + $0xe8] sm:$0xff] %v179
                %v181 = vld [vmem:[%s119 + $0x550] sm:$0xff]
                %182 = vst [vmem:[%s120 + $0xf0] sm:$0xff] %v181
                %v183 = vld [vmem:[%s119 + $0x558] sm:$0xff]
                %184 = vst [vmem:[%s120 + $0xf8] sm:$0xff] %v183
              $region37: #{wpt3d.1} parent=31 // loop_footer
                %s118 = sadd.s32 1, %s114
              $region38: #{wpt3d.1} parent=31 // loop_footer_branch
                %113 = sbr.rel target = $region34
              $region39: #{wpt3d.1} parent=31 // loop_exit
                _
            $region32: #{wpt3d.1} parent=23 // pred_fallthru
              _
          $region24: #{wpt3d.1} parent=19 // pred_fallthru
            _
          %261 = vnop
        $region20: #{wpt3d.1} parent=15 // pred_fallthru
          _
      $region16: #{wpt3d.1} parent=5 // pred_fallthru
        _
      %p262 = scmp.le.s32.totalorder 1, %s7
      %p263 = scmp.lt.s32.totalorder %s7, 7
      %p264 = pnand %p262, %p263
      %p265 = pneg %p264
      // Predicated region
      $region55: #{wpt3d.1} parent=5 // pred_check
        _
      $region56: #{wpt3d.1} parent=5 // pred_check_branch
        %267 = sbr.rel (%p264) target = $region58
      $region57: #{wpt3d.1} parent=5 // pred_region
        %s268 = ssub.s32 %s7, 1
        %s269 = sand.u32 %s34, 1
        %s270 = sand.u32 %s34, 1
        %s271 = smul.addr %s270, 256
        %s272 = scalar_lea.vmem [#allocation2], %s271
        // Predicated region
        $region59: #{wpt3d.1} parent=57 // pred_check
          %p273 = pneg %p47
        $region60: #{wpt3d.1} parent=57 // pred_check_branch
          %275 = sbr.rel (%p273) target = $region62
        $region61: #{wpt3d.1} parent=57 // pred_region
          _
        $region62: #{wpt3d.1} parent=57 // pred_fallthru
          _
        %s276 = sand.u32 %s34, 1
        %s277 = sand.u32 %s34, 1
        %s278 = smul.addr %s277, 256
        %s279 = scalar_lea.vmem [#allocation2], %s278
        %p280 = pneg %p47
        %p281 = pneg %p44
        %p282 = pneg %p75
        %p283 = pneg %p72
        %s284 = smul.u32 4, %s17
        %p285 = scmp.lt.s32.totalorder %s16, 5
        %s286 = scalar_select %p285, %s16, 5
        %p287 = scmp.lt.s32.totalorder %s284, 3
        %s288 = scalar_select %p287, %s284, 3
        %s289 = smul.addr %s286, 32
        %s290 = sadd.s32 %s288, %s289
        %s291 = smul.addr %s290, 8
        %s292 = scalar_lea.vmem %s1, %s291
        %s293 = smul.u32 4, %s17
        %s294 = smul.u32 4, %s17
        %p295 = scmp.lt.s32.totalorder %s16, 5
        %s296 = scalar_select %p295, %s16, 5
        %p297 = scmp.lt.s32.totalorder %s294, 3
        %s298 = scalar_select %p297, %s294, 3
        %s299 = smul.addr %s296, 32
        %s300 = sadd.s32 %s298, %s299
        %s301 = smul.addr %s300, 8
        %s302 = scalar_lea.vmem %s1, %s301
        %s303 = smul.u32 4, %s17
        %v304 = vld [vmem:[%s272] sm:$0xff]
        %v305 = vld [vmem:[%s272 + $0x8] sm:$0xff]
        %v306 = vld [vmem:[%s272 + $0x10] sm:$0xff]
        %v307 = vld [vmem:[%s272 + $0x18] sm:$0xff]
        %s308 = scalar_lea.vmem %s272, 32 [#allocation2]
        %v309 = vld [vmem:[%s308] sm:$0xff]
        %v310 = vld [vmem:[%s308 + $0x8] sm:$0xff]
        %v311 = vld [vmem:[%s308 + $0x10] sm:$0xff]
        %v312 = vld [vmem:[%s308 + $0x18] sm:$0xff]
        %v313 = vadd.f32 %v304, %v309
        %v314 = vadd.f32 %v305, %v310
        %v315 = vadd.f32 %v306, %v311
        %v316 = vadd.f32 %v307, %v312
        %v317 = vsub.f32 %v304, %v309
        %v318 = vsub.f32 %v305, %v310
        %v319 = vsub.f32 %v306, %v311
        %v320 = vsub.f32 %v307, %v312
        %s321 = scalar_lea.vmem %s272, 64 [#allocation2]
        %v322 = vld [vmem:[%s321] sm:$0xff]
        %v323 = vld [vmem:[%s321 + $0x8] sm:$0xff]
        %v324 = vld [vmem:[%s321 + $0x10] sm:$0xff]
        %v325 = vld [vmem:[%s321 + $0x18] sm:$0xff]
        %s326 = scalar_lea.vmem %s272, 96 [#allocation2]
        %v327 = vld [vmem:[%s326] sm:$0xff]
        %v328 = vld [vmem:[%s326 + $0x8] sm:$0xff]
        %v329 = vld [vmem:[%s326 + $0x10] sm:$0xff]
        %v330 = vld [vmem:[%s326 + $0x18] sm:$0xff]
        %v331 = vadd.f32 %v322, %v327
        %v332 = vadd.f32 %v323, %v328
        %v333 = vadd.f32 %v324, %v329
        %v334 = vadd.f32 %v325, %v330
        %v335 = vsub.f32 %v322, %v327
        %v336 = vsub.f32 %v323, %v328
        %v337 = vsub.f32 %v324, %v329
        %v338 = vsub.f32 %v325, %v330
        %s339 = scalar_lea.vmem %s272, 128 [#allocation2]
        %v340 = vld [vmem:[%s339] sm:$0xff]
        %v341 = vld [vmem:[%s339 + $0x8] sm:$0xff]
        %v342 = vld [vmem:[%s339 + $0x10] sm:$0xff]
        %v343 = vld [vmem:[%s339 + $0x18] sm:$0xff]
        %s344 = scalar_lea.vmem %s272, 160 [#allocation2]
        %v345 = vld [vmem:[%s344] sm:$0xff]
        %v346 = vld [vmem:[%s344 + $0x8] sm:$0xff]
        %v347 = vld [vmem:[%s344 + $0x10] sm:$0xff]
        %v348 = vld [vmem:[%s344 + $0x18] sm:$0xff]
        %v349 = vadd.f32 %v340, %v345
        %v350 = vadd.f32 %v341, %v346
        %v351 = vadd.f32 %v342, %v347
        %v352 = vadd.f32 %v343, %v348
        %v353 = vsub.f32 %v340, %v345
        %v354 = vsub.f32 %v341, %v346
        %v355 = vsub.f32 %v342, %v347
        %v356 = vsub.f32 %v343, %v348
        %s357 = scalar_lea.vmem %s272, 192 [#allocation2]
        %v358 = vld [vmem:[%s357] sm:$0xff]
        %v359 = vld [vmem:[%s357 + $0x8] sm:$0xff]
        %v360 = vld [vmem:[%s357 + $0x10] sm:$0xff]
        %v361 = vld [vmem:[%s357 + $0x18] sm:$0xff]
        %s362 = scalar_lea.vmem %s272, 224 [#allocation2]
        %v363 = vld [vmem:[%s362] sm:$0xff]
        %v364 = vld [vmem:[%s362 + $0x8] sm:$0xff]
        %v365 = vld [vmem:[%s362 + $0x10] sm:$0xff]
        %v366 = vld [vmem:[%s362 + $0x18] sm:$0xff]
        %v367 = vadd.f32 %v358, %v363
        %v368 = vadd.f32 %v359, %v364
        %v369 = vadd.f32 %v360, %v365
        %v370 = vadd.f32 %v361, %v366
        %v371 = vsub.f32 %v358, %v363
        %v372 = vsub.f32 %v359, %v364
        %v373 = vsub.f32 %v360, %v365
        %v374 = vsub.f32 %v361, %v366
        %v375 = vadd.f32 %v313, %v331
        %v376 = vadd.f32 %v314, %v332
        %v377 = vadd.f32 %v315, %v333
        %v378 = vadd.f32 %v316, %v334
        %v379 = vsub.f32 %v313, %v331
        %v380 = vsub.f32 %v314, %v332
        %v381 = vsub.f32 %v315, %v333
        %v382 = vsub.f32 %v316, %v334
        %v383 = vadd.f32 %v349, %v367
        %v384 = vadd.f32 %v350, %v368
        %v385 = vadd.f32 %v351, %v369
        %v386 = vadd.f32 %v352, %v370
        %v387 = vsub.f32 %v349, %v367
        %v388 = vsub.f32 %v350, %v368
        %v389 = vsub.f32 %v351, %v369
        %v390 = vsub.f32 %v352, %v370
        %v391 = vadd.f32 %v375, %v383
        %v392 = vadd.f32 %v376, %v384
        %v393 = vadd.f32 %v377, %v385
        %v394 = vadd.f32 %v378, %v386
        %v395 = vmul.f32 %v391, 0.35355338
        %v396 = vmul.f32 %v392, 0.35355338
        %v397 = vmul.f32 %v393, 0.35355338
        %v398 = vmul.f32 %v394, 0.35355338
        %399 = vst [vmem:[%s302] sm:$0xff] %v395
        %400 = vst [vmem:[%s302 + $0x8] sm:$0xff] %v396
        %401 = vst [vmem:[%s302 + $0x10] sm:$0xff] %v397
        %402 = vst [vmem:[%s302 + $0x18] sm:$0xff] %v398
        %v403 = vsub.f32 %v375, %v383
        %v404 = vsub.f32 %v376, %v384
        %v405 = vsub.f32 %v377, %v385
        %v406 = vsub.f32 %v378, %v386
        %v407 = vmul.f32 %v403, 0.35355338
        %v408 = vmul.f32 %v404, 0.35355338
        %v409 = vmul.f32 %v405, 0.35355338
        %v410 = vmul.f32 %v406, 0.35355338
        %s411 = scalar_lea.vmem %s302, 32
        %412 = vst [vmem:[%s411] sm:$0xff] %v407
        %413 = vst [vmem:[%s411 + $0x8] sm:$0xff] %v408
        %414 = vst [vmem:[%s411 + $0x10] sm:$0xff] %v409
        %415 = vst [vmem:[%s411 + $0x18] sm:$0xff] %v410
        %v416 = vadd.f32 %v379, %v387
        %v417 = vadd.f32 %v380, %v388
        %v418 = vadd.f32 %v381, %v389
        %v419 = vadd.f32 %v382, %v390
        %v420 = vmul.f32 %v416, 0.35355338
        %v421 = vmul.f32 %v417, 0.35355338
        %v422 = vmul.f32 %v418, 0.35355338
        %v423 = vmul.f32 %v419, 0.35355338
        %s424 = scalar_lea.vmem %s302, 64
        %425 = vst [vmem:[%s424] sm:$0xff] %v420
        %426 = vst [vmem:[%s424 + $0x8] sm:$0xff] %v421
        %427 = vst [vmem:[%s424 + $0x10] sm:$0xff] %v422
        %428 = vst [vmem:[%s424 + $0x18] sm:$0xff] %v423
        %v429 = vsub.f32 %v379, %v387
        %v430 = vsub.f32 %v380, %v388
        %v431 = vsub.f32 %v381, %v389
        %v432 = vsub.f32 %v382, %v390
        %v433 = vmul.f32 %v429, 0.35355338
        %v434 = vmul.f32 %v430, 0.35355338
        %v435 = vmul.f32 %v431, 0.35355338
        %v436 = vmul.f32 %v432, 0.35355338
        %s437 = scalar_lea.vmem %s302, 96
        %438 = vst [vmem:[%s437] sm:$0xff] %v433
        %439 = vst [vmem:[%s437 + $0x8] sm:$0xff] %v434
        %440 = vst [vmem:[%s437 + $0x10] sm:$0xff] %v435
        %441 = vst [vmem:[%s437 + $0x18] sm:$0xff] %v436
        %v442 = vadd.f32 %v317, %v335
        %v443 = vadd.f32 %v318, %v336
        %v444 = vadd.f32 %v319, %v337
        %v445 = vadd.f32 %v320, %v338
        %v446 = vsub.f32 %v317, %v335
        %v447 = vsub.f32 %v318, %v336
        %v448 = vsub.f32 %v319, %v337
        %v449 = vsub.f32 %v320, %v338
        %v450 = vadd.f32 %v353, %v371
        %v451 = vadd.f32 %v354, %v372
        %v452 = vadd.f32 %v355, %v373
        %v453 = vadd.f32 %v356, %v374
        %v454 = vsub.f32 %v353, %v371
        %v455 = vsub.f32 %v354, %v372
        %v456 = vsub.f32 %v355, %v373
        %v457 = vsub.f32 %v356, %v374
        %v458 = vadd.f32 %v442, %v450
        %v459 = vadd.f32 %v443, %v451
        %v460 = vadd.f32 %v444, %v452
        %v461 = vadd.f32 %v445, %v453
        %v462 = vmul.f32 %v458, 0.35355338
        %v463 = vmul.f32 %v459, 0.35355338
        %v464 = vmul.f32 %v460, 0.35355338
        %v465 = vmul.f32 %v461, 0.35355338
        %s466 = scalar_lea.vmem %s302, 128
        %467 = vst [vmem:[%s466] sm:$0xff] %v462
        %468 = vst [vmem:[%s466 + $0x8] sm:$0xff] %v463
        %469 = vst [vmem:[%s466 + $0x10] sm:$0xff] %v464
        %470 = vst [vmem:[%s466 + $0x18] sm:$0xff] %v465
        %v471 = vsub.f32 %v442, %v450
        %v472 = vsub.f32 %v443, %v451
        %v473 = vsub.f32 %v444, %v452
        %v474 = vsub.f32 %v445, %v453
        %v475 = vmul.f32 %v471, 0.35355338
        %v476 = vmul.f32 %v472, 0.35355338
        %v477 = vmul.f32 %v473, 0.35355338
        %v478 = vmul.f32 %v474, 0.35355338
        %s479 = scalar_lea.vmem %s302, 160
        %480 = vst [vmem:[%s479] sm:$0xff] %v475
        %481 = vst [vmem:[%s479 + $0x8] sm:$0xff] %v476
        %482 = vst [vmem:[%s479 + $0x10] sm:$0xff] %v477
        %483 = vst [vmem:[%s479 + $0x18] sm:$0xff] %v478
        %v484 = vadd.f32 %v446, %v454
        %v485 = vadd.f32 %v447, %v455
        %v486 = vadd.f32 %v448, %v456
        %v487 = vadd.f32 %v449, %v457
        %v488 = vmul.f32 %v484, 0.35355338
        %v489 = vmul.f32 %v485, 0.35355338
        %v490 = vmul.f32 %v486, 0.35355338
        %v491 = vmul.f32 %v487, 0.35355338
        %s492 = scalar_lea.vmem %s302, 192
        %493 = vst [vmem:[%s492] sm:$0xff] %v488
        %494 = vst [vmem:[%s492 + $0x8] sm:$0xff] %v489
        %495 = vst [vmem:[%s492 + $0x10] sm:$0xff] %v490
        %496 = vst [vmem:[%s492 + $0x18] sm:$0xff] %v491
        %v497 = vsub.f32 %v446, %v454
        %v498 = vsub.f32 %v447, %v455
        %v499 = vsub.f32 %v448, %v456
        %v500 = vsub.f32 %v449, %v457
        %v501 = vmul.f32 %v497, 0.35355338
        %v502 = vmul.f32 %v498, 0.35355338
        %v503 = vmul.f32 %v499, 0.35355338
        %v504 = vmul.f32 %v500, 0.35355338
        %s505 = scalar_lea.vmem %s302, 224
        %506 = vst [vmem:[%s505] sm:$0xff] %v501
        %507 = vst [vmem:[%s505 + $0x8] sm:$0xff] %v502
        %508 = vst [vmem:[%s505 + $0x10] sm:$0xff] %v503
        %509 = vst [vmem:[%s505 + $0x18] sm:$0xff] %v504
        %s510 = smul.u32 4, %s17
        %p511 = scmp.lt.s32.totalorder %s16, 5
        %s512 = scalar_select %p511, %s16, 5
        %p513 = scmp.lt.s32.totalorder %s510, 3
        %s514 = scalar_select %p513, %s510, 3
        %s515 = smul.addr %s512, 32
        %s516 = sadd.s32 %s514, %s515
        %s517 = smul.addr %s516, 8
        %s518 = scalar_lea.vmem %s1, %s517
        // Predicated region
        $region63: #{wpt3d.1} parent=57 // pred_check
          %p519 = pneg %p72
        $region64: #{wpt3d.1} parent=57 // pred_check_branch
          %521 = sbr.rel (%p519) target = $region66
        $region65: #{wpt3d.1} parent=57 // pred_region
          %s522 = smul.u32 4, %s17
        $region66: #{wpt3d.1} parent=57 // pred_fallthru
          _
      $region58: #{wpt3d.1} parent=5 // pred_fallthru
        _
      %p523 = scmp.le.s32.totalorder 2, %s7
      // Predicated region
      $region67: #{wpt3d.1} parent=5 // pred_check
        %p524 = pneg %p523
      $region68: #{wpt3d.1} parent=5 // pred_check_branch
        %526 = sbr.rel (%p524) target = $region70
      $region69: #{wpt3d.1} parent=5 // pred_region
        %s527 = ssub.s32 %s7, 2
        // Predicated region
        $region71: #{wpt3d.1} parent=69 // pred_check
          %p528 = pneg %p78
        $region72: #{wpt3d.1} parent=69 // pred_check_branch
          %530 = sbr.rel (%p528) target = $region74
        $region73: #{wpt3d.1} parent=69 // pred_region
          %s531 = smul.u32 4, %s19
          %p532 = scmp.lt.s32.totalorder %s18, 5
          %s533 = scalar_select %p532, %s18, 5
          %p534 = scmp.lt.s32.totalorder %s531, 3
          %s535 = scalar_select %p534, %s531, 3
          %s536 = smul.addr %s533, 32
          %s537 = sadd.s32 %s535, %s536
          %s538 = smul.addr %s537, 8
          %s539 = scalar_lea.vmem %s1, %s538
        $region74: #{wpt3d.1} parent=69 // pred_fallthru
          _
      $region70: #{wpt3d.1} parent=5 // pred_fallthru
        _
    $region6: #{wpt3d.1} parent=1 // loop_footer
      %s11 = sadd.s32 1, %s7
    $region7: #{wpt3d.1} parent=1 // loop_footer_branch
      %6 = sbr.rel target = $region3
    $region8: #{wpt3d.1} parent=1 // loop_exit
      _

</llo_original>
